<compile_context>
chip_gen: v7x
topology: tpu7x:2x2x1
jax: 0.10.0
libtpu: 0.0.40
codegen_flags: <defaults>
</compile_context>

<pallas_src>
import jax
import jax.numpy as jnp
from jax.experimental import pallas as pl
from jax.experimental.pallas import tpu as pltpu

# ----------------------------- problem sizes -----------------------------
NUM_NODES = 16
NUM_CLUSTERS = 4
NUM_SLEPIANS = 8
IN_CH = 4
HIDDEN = 32
OUT_CH = 4
BATCH = 2

LANE = 128                      # lane-dense padding for kernel I/O
SUBLANE = 8                     # sublane padding for the batch dim
NF = NUM_NODES * IN_CH          # 64
NO = NUM_NODES * OUT_CH         # 64
KH = NUM_SLEPIANS * HIDDEN      # 256


# ------------------------------ Pallas kernel -----------------------------
# Single invocation (grid=()): the whole (padded) batch is one slab.
#   x   : (8, 128)  bf16   node features, zero-padded rows/lanes
#   pw1 : (128, 256) bf16  kron(s_k, I_F) @ blkdiag(W1), zero-padded rows
#   w2  : (256, 256) bf16  blkdiag(W2)
#   w3q : (256, 128) bf16  blkdiag(W3) @ kron(s_k^T, I_O), zero-padded cols
#   o   : (8, 128)  f32
def _slep_mlp_kernel(x_ref, pw1_ref, w2_ref, w3q_ref, o_ref):
    f32 = jnp.float32
    h1 = jnp.dot(x_ref[...], pw1_ref[...], preferred_element_type=f32)   # (8, 256)
    h1 = jnp.maximum(h1, 0.0).astype(jnp.bfloat16)
    h2 = jnp.dot(h1, w2_ref[...], preferred_element_type=f32)            # (8, 256)
    h2 = jnp.maximum(h2, 0.0).astype(jnp.bfloat16)
    o_ref[...] = jnp.dot(h2, w3q_ref[...], preferred_element_type=f32)   # (8, 128)


def slep_filter(x_pad, pw1_pad, w2_bd, w3q_pad):
    b_pad = x_pad.shape[0]
    n_out = w3q_pad.shape[1]
    vmem = lambda: pl.BlockSpec(memory_space=pltpu.MemorySpace.VMEM)
    flops = 2 * b_pad * (x_pad.shape[1] * pw1_pad.shape[1]
                         + pw1_pad.shape[1] * w2_bd.shape[1]
                         + w2_bd.shape[1] * n_out)
    bytes_accessed = ((x_pad.size + pw1_pad.size + w2_bd.size + w3q_pad.size) * 2
                      + b_pad * n_out * 4)
    return pl.pallas_call(
        _slep_mlp_kernel,
        out_shape=jax.ShapeDtypeStruct((b_pad, n_out), jnp.float32),
        in_specs=[vmem() for _ in range(4)],
        out_specs=vmem(),
        cost_estimate=pl.CostEstimate(flops=flops, transcendentals=0,
                                      bytes_accessed=bytes_accessed),
    )(x_pad, pw1_pad, w2_bd, w3q_pad)


# --------------------------- parameter packing ----------------------------
def _block_diag(w):
    """(K, A, B) per-slepian weights -> (K*A, K*B) block-diagonal matrix."""
    k, a, b = w.shape
    eye_k = jnp.eye(k, dtype=w.dtype)
    return (eye_k[:, None, :, None] * w[:, :, None, :]).reshape(k * a, k * b)


def pack_params(cluster_masks, att_w, att_b, uk, w1, w2, w3):
    """Pack once outside the kernel. Only W2 needs a block-diagonal (W1/W3 get
    folded with the data-dependent slepian basis per call); pre-cast to bf16."""
    return (cluster_masks, att_w, att_b, uk,
            w1, _block_diag(w2).astype(jnp.bfloat16), w3)


# --------------------------------- forward --------------------------------
def forward(h_flat, batch_vec, params):
    del batch_vec  # batch size derived statically from shapes (jit-safe)
    cm, att_w, att_b, uk, w1, w2_bd_bf16, w3 = params
    batch_size = h_flat.shape[0] // NUM_NODES
    h = h_flat.reshape(batch_size, NUM_NODES, IN_CH)

    # --- attention pooling -> node mask -> concentration matrix (plain JAX) ---
    cluster_feats = jnp.einsum('cn,bnf->bcf', cm, h)                      # (B, C, F)
    att_scores = jax.nn.sigmoid(cluster_feats @ att_w + att_b)[..., 0]    # (B, C)
    node_mask = att_scores @ cm                                           # (B, N)
    binary = (node_mask > 0.5).astype(jnp.float32)
    # C = (U W)^T diag(mask[0]) (U W)   — module uses batch element 0's mask
    c_mat = uk.T @ (binary[0][:, None] * uk)                              # (K, K)

    # TODO(synk): torch.linalg.eigh has no Pallas equivalent; stays in plain JAX.
    _, s = jnp.linalg.eigh(c_mat)
    s_k = uk @ s[:, :NUM_SLEPIANS]                                        # (N, K)

    # Fold slepian projection / back-projection into the first / last MLP
    # layers (in f32, then quantize once):
    #   pw1[n*F+f, k*H+c] = s_k[n,k] * W1[k,f,c]   (== kron(s_k,I_F) @ blkdiag(W1))
    #   w3q[k*H+h, n*O+o] = W3[k,h,o] * s_k[n,k]   (== blkdiag(W3) @ kron(s_k^T,I_O))
    pw1 = jnp.einsum('nk,kfc->nfkc', s_k, w1).reshape(NF, KH)             # (64, 256)
    w3q = jnp.einsum('kho,nk->khno', w3, s_k).reshape(KH, NO)             # (256, 64)

    # Lane/sublane pad so every kernel tile is a full (8,128)-aligned slab.
    b_pad = max(SUBLANE, -(-batch_size // SUBLANE) * SUBLANE)
    x = h_flat.reshape(batch_size, NF)                                    # (B, 64)
    x_pad = jnp.zeros((b_pad, LANE), jnp.float32).at[:batch_size, :NF].set(x)
    pw1_pad = jnp.zeros((LANE, KH), jnp.float32).at[:NF, :].set(pw1)
    w3q_pad = jnp.zeros((KH, LANE), jnp.float32).at[:, :NO].set(w3q)

    # --- main slepian filtering path (single Pallas kernel) ---
    out_pad = slep_filter(x_pad.astype(jnp.bfloat16),
                          pw1_pad.astype(jnp.bfloat16),
                          w2_bd_bf16,
                          w3q_pad.astype(jnp.bfloat16))                   # (8, 128)
    return out_pad[:batch_size, :NO].reshape(-1, OUT_CH)                  # (B*N, O)


# ----------------------------- pure-JAX reference --------------------------
def reference(h_flat, batch_size, raw_params):
    cm, att_w, att_b, uk, w1, w2, w3 = raw_params
    h = h_flat.reshape(batch_size, NUM_NODES, IN_CH)
    cluster_feats = jnp.einsum('cn,bnf->bcf', cm, h)
    att_scores = jax.nn.sigmoid(cluster_feats @ att_w + att_b)[..., 0]
    node_mask = att_scores @ cm
    binary = (node_mask > 0.5).astype(jnp.float32)
    c_mat = uk.T @ (binary[0][:, None] * uk)
    _, s = jnp.linalg.eigh(c_mat)
    s_k = uk @ s[:, :NUM_SLEPIANS]
    hs = jnp.einsum('bnf,nk->bkf', h, s_k)
    h1 = jax.nn.relu(jnp.einsum('kic,bki->bkc', w1, hs))
    h2 = jax.nn.relu(jnp.einsum('kch,bkc->bkh', w2, h1))
    hf = jnp.einsum('kho,bkh->bko', w3, h2)
    return jnp.einsum('nk,bko->bno', s_k, hf).reshape(-1, OUT_CH)


if __name__ == "__main__":
    key = jax.random.PRNGKey(0)
    ks = jax.random.split(key, 8)

    # deterministic "randn" parameters (mirrors torch.randn in __init__)
    W1 = jax.random.normal(ks[0], (NUM_SLEPIANS, IN_CH, HIDDEN), jnp.float32)
    W2 = jax.random.normal(ks[1], (NUM_SLEPIANS, HIDDEN, HIDDEN), jnp.float32)
    W3 = jax.random.normal(ks[2], (NUM_SLEPIANS, HIDDEN, OUT_CH), jnp.float32)
    att_w = jax.random.normal(ks[3], (IN_CH, 1), jnp.float32) / jnp.sqrt(IN_CH)
    att_b = jax.random.normal(ks[4], (1, 1), jnp.float32) * 0.1

    # synthetic symmetric adjacency (no self loops) + Laplacian eigenbasis
    a = jax.random.uniform(ks[5], (NUM_NODES, NUM_NODES), jnp.float32)
    adj = ((a + a.T) > 1.0).astype(jnp.float32) * (1.0 - jnp.eye(NUM_NODES))
    deg = jnp.sum(adj, axis=1)
    L = jnp.diag(deg) - adj + 1e-5 * jnp.eye(NUM_NODES, dtype=jnp.float32)
    _, U = jnp.linalg.eigh(L)
    UK = U[:, :NUM_SLEPIANS]                         # = U @ eye(N)[:, :K]

    # disjoint cluster masks: contiguous blocks of nodes
    cluster_masks = (
        (jnp.arange(NUM_NODES)[None, :] // (NUM_NODES // NUM_CLUSTERS))
        == jnp.arange(NUM_CLUSTERS)[:, None]
    ).astype(jnp.float32)                            # (C, N)

    raw_params = (cluster_masks, att_w, att_b, UK, W1, W2, W3)
    params = pack_params(*raw_params)                # block-diag W2 (bf16), once

    # inputs (H flattened like PyG node features, plus batch assignment vector)
    H_flat = jax.random.normal(ks[6], (BATCH * NUM_NODES, IN_CH), jnp.float32)
    batch_vec = jnp.repeat(jnp.arange(BATCH), NUM_NODES)

    out = jax.block_until_ready(forward(H_flat, batch_vec, params))
    ref = jax.block_until_ready(reference(H_flat, BATCH, raw_params))

    assert out.shape == (BATCH * NUM_NODES, OUT_CH)
    # bf16 MXU operands -> scale-relative 2% check (near-zero outputs carry the
    # absolute quantisation error of the O(10)-magnitude intermediates).
    scale = float(jnp.max(jnp.abs(ref)))
    max_err = float(jnp.max(jnp.abs(out - ref)))
    assert max_err <= 2e-2 * scale + 2e-2, f"mismatch vs reference: {max_err} (scale {scale})"

    print("KERNEL_OK")
</pallas_src>

<mosaic_0001>
module attributes {stable_mosaic.version = 11 : i64} {
  func.func @_slep_mlp_kernel(%arg0: memref<8x128xbf16, #tpu.memory_space<vmem>>, %arg1: memref<128x256xbf16, #tpu.memory_space<vmem>>, %arg2: memref<256x256xbf16, #tpu.memory_space<vmem>>, %arg3: memref<256x128xbf16, #tpu.memory_space<vmem>>, %arg4: memref<8x128xf32, #tpu.memory_space<vmem>>) attributes {dimension_semantics = [], scalar_prefetch = 0 : i64, scratch_operands = 0 : i64, tpu.core_type = #tpu.core_type<tc>} {
    %c0 = arith.constant 0 : index
    %c0_0 = arith.constant 0 : index
    %0 = vector.load %arg0[%c0, %c0_0] : memref<8x128xbf16, #tpu.memory_space<vmem>>, vector<8x128xbf16>
    %c0_1 = arith.constant 0 : index
    %c0_2 = arith.constant 0 : index
    %1 = vector.load %arg1[%c0_1, %c0_2] : memref<128x256xbf16, #tpu.memory_space<vmem>>, vector<128x256xbf16>
    %cst = arith.constant dense<0.000000e+00> : vector<8x256xf32>
    %2 = tpu.matmul %0, %1, %cst {dimension_numbers = #tpu.dot_dimension_numbers<[1], [0], [0], [1], [0, 0, 1, 1], [], []>} : vector<8x128xbf16>, vector<128x256xbf16>, vector<8x256xf32> -> vector<8x256xf32>
    %cst_3 = arith.constant 0.000000e+00 : f32
    %3 = vector.broadcast %cst_3 : f32 to vector<8x256xf32>
    %4 = arith.maximumf %2, %3 : vector<8x256xf32>
    %5 = arith.truncf %4 : vector<8x256xf32> to vector<8x256xbf16>
    %c0_4 = arith.constant 0 : index
    %c0_5 = arith.constant 0 : index
    %6 = vector.load %arg2[%c0_4, %c0_5] : memref<256x256xbf16, #tpu.memory_space<vmem>>, vector<256x256xbf16>
    %cst_6 = arith.constant dense<0.000000e+00> : vector<8x256xf32>
    %7 = tpu.matmul %5, %6, %cst_6 {dimension_numbers = #tpu.dot_dimension_numbers<[1], [0], [0], [1], [0, 0, 1, 1], [], []>} : vector<8x256xbf16>, vector<256x256xbf16>, vector<8x256xf32> -> vector<8x256xf32>
    %cst_7 = arith.constant 0.000000e+00 : f32
    %8 = vector.broadcast %cst_7 : f32 to vector<8x256xf32>
    %9 = arith.maximumf %7, %8 : vector<8x256xf32>
    %10 = arith.truncf %9 : vector<8x256xf32> to vector<8x256xbf16>
    %c0_8 = arith.constant 0 : index
    %c0_9 = arith.constant 0 : index
    %11 = vector.load %arg3[%c0_8, %c0_9] : memref<256x128xbf16, #tpu.memory_space<vmem>>, vector<256x128xbf16>
    %cst_10 = arith.constant dense<0.000000e+00> : vector<8x128xf32>
    %12 = tpu.matmul %10, %11, %cst_10 {dimension_numbers = #tpu.dot_dimension_numbers<[1], [0], [0], [1], [0, 0, 1, 1], [], []>} : vector<8x256xbf16>, vector<256x128xbf16>, vector<8x128xf32> -> vector<8x128xf32>
    %c0_11 = arith.constant 0 : index
    %c0_12 = arith.constant 0 : index
    %13 = vector.load %arg4[%c0_11, %c0_12] : memref<8x128xf32, #tpu.memory_space<vmem>>, vector<8x128xf32>
    tpu.vector_store %arg4[%c0_11, %c0_12], %12 {strides = array<i32>} : memref<8x128xf32, #tpu.memory_space<vmem>>, vector<8x128xf32>,
    return
  }
}

</mosaic_0001>

<llo_original>
// kernel: tpu_custom_call.1
$region0: #{tpu_custom_call.1}
  #allocation0 [shape = 'u32[]', space=smem, size = 0x4, offset = 0x4, fixed_abs, tag = 'smem constant byte address 0x4 - core index']
  #allocation1 [shape = 'u32[144,128]{1,0:T(1,128)}', space=vmem, size = 0x12000, scoped, tag = 'internal scratch']
  %s0 = inlined_call_operand.hbm [shape: bf16[8,128], index: 0, kind: input, shape index: {}]
  %s1 = inlined_call_operand.hbm [shape: bf16[128,256], index: 1, kind: input, shape index: {}]
  %s2 = inlined_call_operand.hbm [shape: bf16[256,256], index: 2, kind: input, shape index: {}]
  %s3 = inlined_call_operand.hbm [shape: bf16[256,128], index: 3, kind: input, shape index: {}]
  %s4 = inlined_call_operand.hbm [shape: f32[8,128], index: 4, kind: output, shape index: {}]
  %s5 = sld [smem:[#allocation0]]
  $region42: #{tpu_custom_call.1} parent=0
    _
  %s7 = ssub.s32 1, %s5
  %s8 = scalar_select 0, %s7, %s5
  $region1: #{tpu_custom_call.1} parent=0
    #allocation2 [shape = 'u8[2048]{0}', space=vmem, size = 0x800, scoped, tag = 'input window, operand 0, single buffered']
    #allocation3 [shape = 's32[1]{0}', space=sflag, size = 0x4, scoped, tag = 'scoped memory for tpu_custom_call.1']
    #allocation4 [shape = 's32[1]{0}', space=sflag, size = 0x4, scoped, tag = 'scoped memory for tpu_custom_call.1']
    #allocation5 [shape = 'u8[65536]{0}', space=vmem, size = 0x10000, scoped, tag = 'input window, operand 1, single buffered']
    #allocation6 [shape = 's32[1]{0}', space=sflag, size = 0x4, scoped, tag = 'scoped memory for tpu_custom_call.1']
    #allocation7 [shape = 'u8[131072]{0}', space=vmem, size = 0x20000, scoped, tag = 'input window, operand 2, single buffered']
    #allocation8 [shape = 'u8[65536]{0}', space=vmem, size = 0x10000, scoped, tag = 'input window, operand 3, single buffered']
    #allocation9 [shape = 's32[1]{0}', space=sflag, size = 0x4, scoped, tag = 'scoped memory for tpu_custom_call.1']
    #allocation10 [shape = 'u8[4096]{0}', space=vmem, size = 0x1000, scoped, tag = 'output window, operand 0, single buffered']
    %9 = vsyncpa [#allocation3], 0
    %10 = vsyncpa [#allocation6], 0
    %11 = vsyncpa [#allocation9], 0
    %12 = vsyncpa [#allocation4], 0
    // Predicated region
    $region2: #{tpu_custom_call.1} parent=1 // pred_check
      _
    $region3: #{tpu_custom_call.1} parent=1 // pred_check_branch
      %14 = sbr.rel (0) target = $region5
    $region4: #{tpu_custom_call.1} parent=1 // pred_region
      %s16 = ssub.s32 64, 64
      %17 = vsyncadd [#allocation3], %s16
      %s19 = sshll.u32 [#allocation2], 4
      %s20 = int_to_ptr.vmem [resolvable:$true] %s19
      %22 = dma.hbm_to_vmem [thread:$0]  %s0, 64, %s20, [#allocation3]
    $region5: #{tpu_custom_call.1} parent=1 // pred_fallthru
      _
    // Predicated region
    $region6: #{tpu_custom_call.1} parent=1 // pred_check
      _
    $region7: #{tpu_custom_call.1} parent=1 // pred_check_branch
      %24 = sbr.rel (0) target = $region9
    $region8: #{tpu_custom_call.1} parent=1 // pred_region
      %s26 = ssub.s32 2048, 2048
      %27 = vsyncadd [#allocation6], %s26
      %s28 = sshll.u32 [#allocation5], 4
      %s29 = int_to_ptr.vmem [resolvable:$true] %s28
      %34 = dma.hbm_to_vmem [thread:$0]  %s1, 2048, %s29, [#allocation6], 128, 128, 8
    $region9: #{tpu_custom_call.1} parent=1 // pred_fallthru
      _
    // Predicated region
    $region10: #{tpu_custom_call.1} parent=1 // pred_check
      _
    $region11: #{tpu_custom_call.1} parent=1 // pred_check_branch
      %36 = sbr.rel (0) target = $region13
    $region12: #{tpu_custom_call.1} parent=1 // pred_region
      %s38 = ssub.s32 4096, 4096
      %39 = vsyncadd [#allocation6], %s38
      %s40 = sshll.u32 [#allocation7], 4
      %s41 = int_to_ptr.vmem [resolvable:$true] %s40
      %46 = dma.hbm_to_vmem [thread:$0]  %s2, 4096, %s41, [#allocation6], 128, 128, 8
    $region13: #{tpu_custom_call.1} parent=1 // pred_fallthru
      _
    // Predicated region
    $region14: #{tpu_custom_call.1} parent=1 // pred_check
      _
    $region15: #{tpu_custom_call.1} parent=1 // pred_check_branch
      %48 = sbr.rel (0) target = $region17
    $region16: #{tpu_custom_call.1} parent=1 // pred_region
      %s50 = ssub.s32 2048, 2048
      %51 = vsyncadd [#allocation9], %s50
      %s52 = sshll.u32 [#allocation8], 4
      %s53 = int_to_ptr.vmem [resolvable:$true] %s52
      %58 = dma.hbm_to_vmem [thread:$0]  %s3, 2048, %s53, [#allocation9], 64, 64, 4
    $region17: #{tpu_custom_call.1} parent=1 // pred_fallthru
      _
    // Predicated region
    $region18: #{tpu_custom_call.1} parent=1 // pred_check
      _
    $region19: #{tpu_custom_call.1} parent=1 // pred_check_branch
      %60 = sbr.rel (0) target = $region21
    $region20: #{tpu_custom_call.1} parent=1 // pred_region
      %61 = dma.done [#allocation3], 64
    $region21: #{tpu_custom_call.1} parent=1 // pred_fallthru
      _
    // Predicated region
    $region22: #{tpu_custom_call.1} parent=1 // pred_check
      _
    $region23: #{tpu_custom_call.1} parent=1 // pred_check_branch
      %63 = sbr.rel (0) target = $region25
    $region24: #{tpu_custom_call.1} parent=1 // pred_region
      %64 = dma.done [#allocation6], 2048
    $region25: #{tpu_custom_call.1} parent=1 // pred_fallthru
      _
    // Predicated region
    $region26: #{tpu_custom_call.1} parent=1 // pred_check
      _
    $region27: #{tpu_custom_call.1} parent=1 // pred_check_branch
      %66 = sbr.rel (0) target = $region29
    $region28: #{tpu_custom_call.1} parent=1 // pred_region
      %67 = dma.done [#allocation6], 4096
    $region29: #{tpu_custom_call.1} parent=1 // pred_fallthru
      _
    // Predicated region
    $region30: #{tpu_custom_call.1} parent=1 // pred_check
      _
    $region31: #{tpu_custom_call.1} parent=1 // pred_check_branch
      %69 = sbr.rel (0) target = $region33
    $region32: #{tpu_custom_call.1} parent=1 // pred_region
      %70 = dma.done [#allocation9], 2048
    $region33: #{tpu_custom_call.1} parent=1 // pred_fallthru
      _
    %v72 = vld [vmem:[#allocation2] sm:$0xf]
    %v73 = vld [vmem:[#allocation5] sm:$0xff]
    %v74 = vld [vmem:[#allocation5 + $0x8] sm:$0xff]
    %v75 = vld [vmem:[#allocation5 + $0x10] sm:$0xff]
    %v76 = vld [vmem:[#allocation5 + $0x18] sm:$0xff]
    %v77 = vld [vmem:[#allocation5 + $0x20] sm:$0xff]
    %v78 = vld [vmem:[#allocation5 + $0x28] sm:$0xff]
    %v79 = vld [vmem:[#allocation5 + $0x30] sm:$0xff]
    %v80 = vld [vmem:[#allocation5 + $0x38] sm:$0xff]
    %v81 = vld [vmem:[#allocation5 + $0x40] sm:$0xff]
    %v82 = vld [vmem:[#allocation5 + $0x48] sm:$0xff]
    %v83 = vld [vmem:[#allocation5 + $0x50] sm:$0xff]
    %v84 = vld [vmem:[#allocation5 + $0x58] sm:$0xff]
    %v85 = vld [vmem:[#allocation5 + $0x60] sm:$0xff]
    %v86 = vld [vmem:[#allocation5 + $0x68] sm:$0xff]
    %v87 = vld [vmem:[#allocation5 + $0x70] sm:$0xff]
    %v88 = vld [vmem:[#allocation5 + $0x78] sm:$0xff]
    %v105 = vunpack.c.l.b16 %v73
    %v106 = vunpack.c.h.b16 %v73
    %v107 = vunpack.c.l.b16 %v74
    %v108 = vunpack.c.h.b16 %v74
    %v109 = vunpack.c.l.b16 %v75
    %v110 = vunpack.c.h.b16 %v75
    %v111 = vunpack.c.l.b16 %v76
    %v112 = vunpack.c.h.b16 %v76
    %v113 = vunpack.c.l.b16 %v77
    %v114 = vunpack.c.h.b16 %v77
    %v115 = vunpack.c.l.b16 %v78
    %v116 = vunpack.c.h.b16 %v78
    %v117 = vunpack.c.l.b16 %v79
    %v118 = vunpack.c.h.b16 %v79
    %v119 = vunpack.c.l.b16 %v80
    %v120 = vunpack.c.h.b16 %v80
    %v121 = vunpack.c.l.b16 %v81
    %v122 = vunpack.c.h.b16 %v81
    %v123 = vunpack.c.l.b16 %v82
    %v124 = vunpack.c.h.b16 %v82
    %v125 = vunpack.c.l.b16 %v83
    %v126 = vunpack.c.h.b16 %v83
    %v127 = vunpack.c.l.b16 %v84
    %v128 = vunpack.c.h.b16 %v84
    %v129 = vunpack.c.l.b16 %v85
    %v130 = vunpack.c.h.b16 %v85
    %v131 = vunpack.c.l.b16 %v86
    %v132 = vunpack.c.h.b16 %v86
    %v133 = vunpack.c.l.b16 %v87
    %v134 = vunpack.c.h.b16 %v87
    %v135 = vunpack.c.l.b16 %v88
    %v136 = vunpack.c.h.b16 %v88
    %v137 = vpack.c.b16 %v107, %v105
    %v138 = vpack.c.b16 %v108, %v106
    %v139 = vpack.c.b16 %v111, %v109
    %v140 = vpack.c.b16 %v112, %v110
    %v141 = vpack.c.b16 %v115, %v113
    %v142 = vpack.c.b16 %v116, %v114
    %v143 = vpack.c.b16 %v119, %v117
    %v144 = vpack.c.b16 %v120, %v118
    %v145 = vpack.c.b16 %v123, %v121
    %v146 = vpack.c.b16 %v124, %v122
    %v147 = vpack.c.b16 %v127, %v125
    %v148 = vpack.c.b16 %v128, %v126
    %v149 = vpack.c.b16 %v131, %v129
    %v150 = vpack.c.b16 %v132, %v130
    %v151 = vpack.c.b16 %v135, %v133
    %v152 = vpack.c.b16 %v136, %v134
    %169 = vmatprep.subr.bf16.mxu0 %v138
    %170 = vmatpush1.bf16.msra.mxu0 %v137
    %171 = vmatprep.subr.bf16.mxu0 %v140
    %172 = vmatpush1.bf16.msra.mxu0 %v139
    %173 = vmatprep.subr.bf16.mxu0 %v142
    %174 = vmatpush1.bf16.msra.mxu0 %v141
    %175 = vmatprep.subr.bf16.mxu0 %v144
    %176 = vmatpush1.bf16.msra.mxu0 %v143
    %177 = vmatprep.subr.bf16.mxu0 %v146
    %178 = vmatpush1.bf16.msra.mxu0 %v145
    %179 = vmatprep.subr.bf16.mxu0 %v148
    %180 = vmatpush1.bf16.msra.mxu0 %v147
    %181 = vmatprep.subr.bf16.mxu0 %v150
    %182 = vmatpush1.bf16.msra.mxu0 %v149
    %183 = vmatprep.subr.bf16.mxu0 %v152
    %184 = vmatpush1.bf16.msra.mxu0 %v151
    %185 = vmatprep.subr.bf16.mxu0 0
    %186 = vmatpush1.bf16.msra.mxu0 0
    %187 = vmatprep.subr.bf16.mxu0 0
    %188 = vmatpush1.bf16.msra.mxu0 0
    %189 = vmatprep.subr.bf16.mxu0 0
    %190 = vmatpush1.bf16.msra.mxu0 0
    %191 = vmatprep.subr.bf16.mxu0 0
    %192 = vmatpush1.bf16.msra.mxu0 0
    %193 = vmatprep.subr.bf16.mxu0 0
    %194 = vmatpush1.bf16.msra.mxu0 0
    %195 = vmatprep.subr.bf16.mxu0 0
    %196 = vmatpush1.bf16.msra.mxu0 0
    %197 = vmatprep.subr.bf16.mxu0 0
    %198 = vmatpush1.bf16.msra.mxu0 0
    %199 = vmatprep.subr.bf16.mxu0 0
    %200 = vmatpush1.bf16.msra.mxu0 0
    %201 = vmatprep.mubr.bf16.mxu0 0
    %202 = vmatmul.mubr.bf16.gmra.mrb[0].mxu0 %v72
    %v203 = vpop.f32.mrb[0].mxu0
    %v204 = vadd.f32 0.0, %v203
    %v205 = vpop.f32.mrb[0].mxu0
    %v206 = vadd.f32 0.0, %v205
    %v207 = vpop.f32.mrb[0].mxu0
    %v208 = vpop.f32.mrb[0].mxu0
    %209 = vdwg.mxu0
    %v210 = vmax.f32 %v204, 0.0
    %v211 = vmax.f32 %v206, 0.0
    %v212 = vpack.c.bf16 %v210, %v210
    %v213 = vpack.c.bf16 %v211, %v211
    %v214 = vld [vmem:[#allocation7] sm:$0xff]
    %v215 = vld [vmem:[#allocation7 + $0x8] sm:$0xff]
    %v216 = vld [vmem:[#allocation7 + $0x10] sm:$0xff]
    %v217 = vld [vmem:[#allocation7 + $0x18] sm:$0xff]
    %v218 = vld [vmem:[#allocation7 + $0x20] sm:$0xff]
    %v219 = vld [vmem:[#allocation7 + $0x28] sm:$0xff]
    %v220 = vld [vmem:[#allocation7 + $0x30] sm:$0xff]
    %v221 = vld [vmem:[#allocation7 + $0x38] sm:$0xff]
    %v222 = vld [vmem:[#allocation7 + $0x40] sm:$0xff]
    %v223 = vld [vmem:[#allocation7 + $0x48] sm:$0xff]
    %v224 = vld [vmem:[#allocation7 + $0x50] sm:$0xff]
    %v225 = vld [vmem:[#allocation7 + $0x58] sm:$0xff]
    %v226 = vld [vmem:[#allocation7 + $0x60] sm:$0xff]
    %v227 = vld [vmem:[#allocation7 + $0x68] sm:$0xff]
    %v228 = vld [vmem:[#allocation7 + $0x70] sm:$0xff]
    %v229 = vld [vmem:[#allocation7 + $0x78] sm:$0xff]
    %v230 = vld [vmem:[#allocation7 + $0x80] sm:$0xff]
    %v231 = vld [vmem:[#allocation7 + $0x88] sm:$0xff]
    %v232 = vld [vmem:[#allocation7 + $0x90] sm:$0xff]
    %v233 = vld [vmem:[#allocation7 + $0x98] sm:$0xff]
    %v234 = vld [vmem:[#allocation7 + $0xa0] sm:$0xff]
    %v235 = vld [vmem:[#allocation7 + $0xa8] sm:$0xff]
    %v236 = vld [vmem:[#allocation7 + $0xb0] sm:$0xff]
    %v237 = vld [vmem:[#allocation7 + $0xb8] sm:$0xff]
    %v238 = vld [vmem:[#allocation7 + $0xc0] sm:$0xff]
    %v239 = vld [vmem:[#allocation7 + $0xc8] sm:$0xff]
    %v240 = vld [vmem:[#allocation7 + $0xd0] sm:$0xff]
    %v241 = vld [vmem:[#allocation7 + $0xd8] sm:$0xff]
    %v242 = vld [vmem:[#allocation7 + $0xe0] sm:$0xff]
    %v243 = vld [vmem:[#allocation7 + $0xe8] sm:$0xff]
    %v244 = vld [vmem:[#allocation7 + $0xf0] sm:$0xff]
    %v245 = vld [vmem:[#allocation7 + $0xf8] sm:$0xff]
    %v278 = vunpack.c.l.b16 %v214
    %v279 = vunpack.c.h.b16 %v214
    %v280 = vunpack.c.l.b16 %v215
    %v281 = vunpack.c.h.b16 %v215
    %v282 = vunpack.c.l.b16 %v216
    %v283 = vunpack.c.h.b16 %v216
    %v284 = vunpack.c.l.b16 %v217
    %v285 = vunpack.c.h.b16 %v217
    %v286 = vunpack.c.l.b16 %v218
    %v287 = vunpack.c.h.b16 %v218
    %v288 = vunpack.c.l.b16 %v219
    %v289 = vunpack.c.h.b16 %v219
    %v290 = vunpack.c.l.b16 %v220
    %v291 = vunpack.c.h.b16 %v220
    %v292 = vunpack.c.l.b16 %v221
    %v293 = vunpack.c.h.b16 %v221
    %v294 = vunpack.c.l.b16 %v222
    %v295 = vunpack.c.h.b16 %v222
    %v296 = vunpack.c.l.b16 %v223
    %v297 = vunpack.c.h.b16 %v223
    %v298 = vunpack.c.l.b16 %v224
    %v299 = vunpack.c.h.b16 %v224
    %v300 = vunpack.c.l.b16 %v225
    %v301 = vunpack.c.h.b16 %v225
    %v302 = vunpack.c.l.b16 %v226
    %v303 = vunpack.c.h.b16 %v226
    %v304 = vunpack.c.l.b16 %v227
    %v305 = vunpack.c.h.b16 %v227
    %v306 = vunpack.c.l.b16 %v228
    %v307 = vunpack.c.h.b16 %v228
    %v308 = vunpack.c.l.b16 %v229
    %v309 = vunpack.c.h.b16 %v229
    %v310 = vunpack.c.l.b16 %v230
    %v311 = vunpack.c.h.b16 %v230
    %v312 = vunpack.c.l.b16 %v231
    %v313 = vunpack.c.h.b16 %v231
    %v314 = vunpack.c.l.b16 %v232
    %v315 = vunpack.c.h.b16 %v232
    %v316 = vunpack.c.l.b16 %v233
    %v317 = vunpack.c.h.b16 %v233
    %v318 = vunpack.c.l.b16 %v234
    %v319 = vunpack.c.h.b16 %v234
    %v320 = vunpack.c.l.b16 %v235
    %v321 = vunpack.c.h.b16 %v235
    %v322 = vunpack.c.l.b16 %v236
    %v323 = vunpack.c.h.b16 %v236
    %v324 = vunpack.c.l.b16 %v237
    %v325 = vunpack.c.h.b16 %v237
    %v326 = vunpack.c.l.b16 %v238
    %v327 = vunpack.c.h.b16 %v238
    %v328 = vunpack.c.l.b16 %v239
    %v329 = vunpack.c.h.b16 %v239
    %v330 = vunpack.c.l.b16 %v240
    %v331 = vunpack.c.h.b16 %v240
    %v332 = vunpack.c.l.b16 %v241
    %v333 = vunpack.c.h.b16 %v241
    %v334 = vunpack.c.l.b16 %v242
    %v335 = vunpack.c.h.b16 %v242
    %v336 = vunpack.c.l.b16 %v243
    %v337 = vunpack.c.h.b16 %v243
    %v338 = vunpack.c.l.b16 %v244
    %v339 = vunpack.c.h.b16 %v244
    %v340 = vunpack.c.l.b16 %v245
    %v341 = vunpack.c.h.b16 %v245
    %v342 = vpack.c.b16 %v280, %v278
    %v343 = vpack.c.b16 %v281, %v279
    %v344 = vpack.c.b16 %v284, %v282
    %v345 = vpack.c.b16 %v285, %v283
    %v346 = vpack.c.b16 %v288, %v286
    %v347 = vpack.c.b16 %v289, %v287
    %v348 = vpack.c.b16 %v292, %v290
    %v349 = vpack.c.b16 %v293, %v291
    %v350 = vpack.c.b16 %v296, %v294
    %v351 = vpack.c.b16 %v297, %v295
    %v352 = vpack.c.b16 %v300, %v298
    %v353 = vpack.c.b16 %v301, %v299
    %v354 = vpack.c.b16 %v304, %v302
    %v355 = vpack.c.b16 %v305, %v303
    %v356 = vpack.c.b16 %v308, %v306
    %v357 = vpack.c.b16 %v309, %v307
    %v358 = vpack.c.b16 %v312, %v310
    %v359 = vpack.c.b16 %v313, %v311
    %v360 = vpack.c.b16 %v316, %v314
    %v361 = vpack.c.b16 %v317, %v315
    %v362 = vpack.c.b16 %v320, %v318
    %v363 = vpack.c.b16 %v321, %v319
    %v364 = vpack.c.b16 %v324, %v322
    %v365 = vpack.c.b16 %v325, %v323
    %v366 = vpack.c.b16 %v328, %v326
    %v367 = vpack.c.b16 %v329, %v327
    %v368 = vpack.c.b16 %v332, %v330
    %v369 = vpack.c.b16 %v333, %v331
    %v370 = vpack.c.b16 %v336, %v334
    %v371 = vpack.c.b16 %v337, %v335
    %v372 = vpack.c.b16 %v340, %v338
    %v373 = vpack.c.b16 %v341, %v339
    %406 = vmatprep.subr.bf16.mxu0 %v343
    %407 = vmatpush1.bf16.msra.mxu0 %v342
    %408 = vmatprep.subr.bf16.mxu0 %v345
    %409 = vmatpush1.bf16.msra.mxu0 %v344
    %410 = vmatprep.subr.bf16.mxu0 %v347
    %411 = vmatpush1.bf16.msra.mxu0 %v346
    %412 = vmatprep.subr.bf16.mxu0 %v349
    %413 = vmatpush1.bf16.msra.mxu0 %v348
    %414 = vmatprep.subr.bf16.mxu0 %v351
    %415 = vmatpush1.bf16.msra.mxu0 %v350
    %416 = vmatprep.subr.bf16.mxu0 %v353
    %417 = vmatpush1.bf16.msra.mxu0 %v352
    %418 = vmatprep.subr.bf16.mxu0 %v355
    %419 = vmatpush1.bf16.msra.mxu0 %v354
    %420 = vmatprep.subr.bf16.mxu0 %v357
    %421 = vmatpush1.bf16.msra.mxu0 %v356
    %422 = vmatprep.subr.bf16.mxu0 %v359
    %423 = vmatpush1.bf16.msra.mxu0 %v358
    %424 = vmatprep.subr.bf16.mxu0 %v361
    %425 = vmatpush1.bf16.msra.mxu0 %v360
    %426 = vmatprep.subr.bf16.mxu0 %v363
    %427 = vmatpush1.bf16.msra.mxu0 %v362
    %428 = vmatprep.subr.bf16.mxu0 %v365
    %429 = vmatpush1.bf16.msra.mxu0 %v364
    %430 = vmatprep.subr.bf16.mxu0 %v367
    %431 = vmatpush1.bf16.msra.mxu0 %v366
    %432 = vmatprep.subr.bf16.mxu0 %v369
    %433 = vmatpush1.bf16.msra.mxu0 %v368
    %434 = vmatprep.subr.bf16.mxu0 %v371
    %435 = vmatpush1.bf16.msra.mxu0 %v370
    %436 = vmatprep.subr.bf16.mxu0 %v373
    %437 = vmatpush1.bf16.msra.mxu0 %v372
    %438 = vmatprep.mubr.bf16.mxu0 %v213
    %439 = vmatmul.mubr.bf16.gmra.mrb[0].mxu0 %v212
    %v440 = vpop.f32.mrb[0].mxu0
    %v441 = vadd.f32 0.0, %v440
    %v442 = vpop.f32.mrb[0].mxu0
    %v443 = vadd.f32 0.0, %v442
    %v444 = vpop.f32.mrb[0].mxu0
    %v445 = vpop.f32.mrb[0].mxu0
    %446 = vdwg.mxu0
    %v447 = vmax.f32 %v441, 0.0
    %v448 = vmax.f32 %v443, 0.0
    %v449 = vpack.c.bf16 %v447, %v447
    %v450 = vpack.c.bf16 %v448, %v448
    %v451 = vld [vmem:[#allocation8] sm:$0xf]
    %v452 = vld [vmem:[#allocation8 + $0x4] sm:$0xf]
    %v453 = vld [vmem:[#allocation8 + $0x8] sm:$0xf]
    %v454 = vld [vmem:[#allocation8 + $0xc] sm:$0xf]
    %v455 = vld [vmem:[#allocation8 + $0x10] sm:$0xf]
    %v456 = vld [vmem:[#allocation8 + $0x14] sm:$0xf]
    %v457 = vld [vmem:[#allocation8 + $0x18] sm:$0xf]
    %v458 = vld [vmem:[#allocation8 + $0x1c] sm:$0xf]
    %v459 = vld [vmem:[#allocation8 + $0x20] sm:$0xf]
    %v460 = vld [vmem:[#allocation8 + $0x24] sm:$0xf]
    %v461 = vld [vmem:[#allocation8 + $0x28] sm:$0xf]
    %v462 = vld [vmem:[#allocation8 + $0x2c] sm:$0xf]
    %v463 = vld [vmem:[#allocation8 + $0x30] sm:$0xf]
    %v464 = vld [vmem:[#allocation8 + $0x34] sm:$0xf]
    %v465 = vld [vmem:[#allocation8 + $0x38] sm:$0xf]
    %v466 = vld [vmem:[#allocation8 + $0x3c] sm:$0xf]
    %v467 = vld [vmem:[#allocation8 + $0x40] sm:$0xf]
    %v468 = vld [vmem:[#allocation8 + $0x44] sm:$0xf]
    %v469 = vld [vmem:[#allocation8 + $0x48] sm:$0xf]
    %v470 = vld [vmem:[#allocation8 + $0x4c] sm:$0xf]
    %v471 = vld [vmem:[#allocation8 + $0x50] sm:$0xf]
    %v472 = vld [vmem:[#allocation8 + $0x54] sm:$0xf]
    %v473 = vld [vmem:[#allocation8 + $0x58] sm:$0xf]
    %v474 = vld [vmem:[#allocation8 + $0x5c] sm:$0xf]
    %v475 = vld [vmem:[#allocation8 + $0x60] sm:$0xf]
    %v476 = vld [vmem:[#allocation8 + $0x64] sm:$0xf]
    %v477 = vld [vmem:[#allocation8 + $0x68] sm:$0xf]
    %v478 = vld [vmem:[#allocation8 + $0x6c] sm:$0xf]
    %v479 = vld [vmem:[#allocation8 + $0x70] sm:$0xf]
    %v480 = vld [vmem:[#allocation8 + $0x74] sm:$0xf]
    %v481 = vld [vmem:[#allocation8 + $0x78] sm:$0xf]
    %v482 = vld [vmem:[#allocation8 + $0x7c] sm:$0xf]
    %v515 = vunpack.c.l.b16 %v451
    %v516 = vunpack.c.l.b16 %v452
    %v517 = vunpack.c.l.b16 %v453
    %v518 = vunpack.c.l.b16 %v454
    %v519 = vunpack.c.l.b16 %v455
    %v520 = vunpack.c.l.b16 %v456
    %v521 = vunpack.c.l.b16 %v457
    %v522 = vunpack.c.l.b16 %v458
    %v523 = vunpack.c.l.b16 %v459
    %v524 = vunpack.c.l.b16 %v460
    %v525 = vunpack.c.l.b16 %v461
    %v526 = vunpack.c.l.b16 %v462
    %v527 = vunpack.c.l.b16 %v463
    %v528 = vunpack.c.l.b16 %v464
    %v529 = vunpack.c.l.b16 %v465
    %v530 = vunpack.c.l.b16 %v466
    %v531 = vunpack.c.l.b16 %v467
    %v532 = vunpack.c.l.b16 %v468
    %v533 = vunpack.c.l.b16 %v469
    %v534 = vunpack.c.l.b16 %v470
    %v535 = vunpack.c.l.b16 %v471
    %v536 = vunpack.c.l.b16 %v472
    %v537 = vunpack.c.l.b16 %v473
    %v538 = vunpack.c.l.b16 %v474
    %v539 = vunpack.c.l.b16 %v475
    %v540 = vunpack.c.l.b16 %v476
    %v541 = vunpack.c.l.b16 %v477
    %v542 = vunpack.c.l.b16 %v478
    %v543 = vunpack.c.l.b16 %v479
    %v544 = vunpack.c.l.b16 %v480
    %v545 = vunpack.c.l.b16 %v481
    %v546 = vunpack.c.l.b16 %v482
    %v547 = vpack.c.b16 %v516, %v515
    %v548 = vpack.c.b16 %v518, %v517
    %v549 = vpack.c.b16 %v520, %v519
    %v550 = vpack.c.b16 %v522, %v521
    %v551 = vpack.c.b16 %v524, %v523
    %v552 = vpack.c.b16 %v526, %v525
    %v553 = vpack.c.b16 %v528, %v527
    %v554 = vpack.c.b16 %v530, %v529
    %v555 = vpack.c.b16 %v532, %v531
    %v556 = vpack.c.b16 %v534, %v533
    %v557 = vpack.c.b16 %v536, %v535
    %v558 = vpack.c.b16 %v538, %v537
    %v559 = vpack.c.b16 %v540, %v539
    %v560 = vpack.c.b16 %v542, %v541
    %v561 = vpack.c.b16 %v544, %v543
    %v562 = vpack.c.b16 %v546, %v545
    %579 = vmatprep.subr.bf16.mxu0 0
    %580 = vmatpush1.bf16.msra.mxu0 %v547
    %581 = vmatprep.subr.bf16.mxu0 0
    %582 = vmatpush1.bf16.msra.mxu0 %v548
    %583 = vmatprep.subr.bf16.mxu0 0
    %584 = vmatpush1.bf16.msra.mxu0 %v549
    %585 = vmatprep.subr.bf16.mxu0 0
    %586 = vmatpush1.bf16.msra.mxu0 %v550
    %587 = vmatprep.subr.bf16.mxu0 0
    %588 = vmatpush1.bf16.msra.mxu0 %v551
    %589 = vmatprep.subr.bf16.mxu0 0
    %590 = vmatpush1.bf16.msra.mxu0 %v552
    %591 = vmatprep.subr.bf16.mxu0 0
    %592 = vmatpush1.bf16.msra.mxu0 %v553
    %593 = vmatprep.subr.bf16.mxu0 0
    %594 = vmatpush1.bf16.msra.mxu0 %v554
    %595 = vmatprep.subr.bf16.mxu0 0
    %596 = vmatpush1.bf16.msra.mxu0 %v555
    %597 = vmatprep.subr.bf16.mxu0 0
    %598 = vmatpush1.bf16.msra.mxu0 %v556
    %599 = vmatprep.subr.bf16.mxu0 0
    %600 = vmatpush1.bf16.msra.mxu0 %v557
    %601 = vmatprep.subr.bf16.mxu0 0
    %602 = vmatpush1.bf16.msra.mxu0 %v558
    %603 = vmatprep.subr.bf16.mxu0 0
    %604 = vmatpush1.bf16.msra.mxu0 %v559
    %605 = vmatprep.subr.bf16.mxu0 0
    %606 = vmatpush1.bf16.msra.mxu0 %v560
    %607 = vmatprep.subr.bf16.mxu0 0
    %608 = vmatpush1.bf16.msra.mxu0 %v561
    %609 = vmatprep.subr.bf16.mxu0 0
    %610 = vmatpush1.bf16.msra.mxu0 %v562
    %611 = vmatprep.mubr.bf16.mxu0 %v450
    %612 = vmatmul.mubr.bf16.gmra.mrb[0].mxu0 %v449
    %v613 = vpop.f32.mrb[0].mxu0
    %v614 = vadd.f32 0.0, %v613
    %v615 = vpop.f32.mrb[0].mxu0
    %v616 = vpop.f32.mrb[0].mxu0
    %v617 = vpop.f32.mrb[0].mxu0
    %618 = vdwg.mxu0
    %619 = vst [vmem:[#allocation10] sm:$0xff] %v614
    // Predicated region
    $region34: #{tpu_custom_call.1} parent=1 // pred_check
      _
    $region35: #{tpu_custom_call.1} parent=1 // pred_check_branch
      %621 = sbr.rel (0) target = $region37
    $region36: #{tpu_custom_call.1} parent=1 // pred_region
      %s623 = ssub.s32 128, 128
      %624 = vsyncadd [#allocation4], %s623
      %s626 = sshll.u32 [#allocation10], 4
      %s627 = int_to_ptr.vmem [resolvable:$true] %s626
      %629 = dma.vmem_to_hbm [thread:$0]  %s627, 128, %s4, [#allocation4]
    $region37: #{tpu_custom_call.1} parent=1 // pred_fallthru
      _
    // Predicated region
    $region38: #{tpu_custom_call.1} parent=1 // pred_check
      _
    $region39: #{tpu_custom_call.1} parent=1 // pred_check_branch
      %631 = sbr.rel (0) target = $region41
    $region40: #{tpu_custom_call.1} parent=1 // pred_region
      %632 = dma.done [#allocation4], 128
    $region41: #{tpu_custom_call.1} parent=1 // pred_fallthru
      _
    %633 = vsyncpa [#allocation3], 1
    %634 = vsyncpa [#allocation6], 1
    %635 = vsyncpa [#allocation9], 1
    %636 = vsyncpa [#allocation4], 1

</llo_original>
